<compile_context>
chip_gen: v7x
topology: tpu7x:2x2x1
jax: 0.10.0
libtpu: 0.0.40
codegen_flags: <defaults>
</compile_context>

<pallas_src>
import jax
import jax.numpy as jnp
from jax.experimental import pallas as pl
from jax.experimental.pallas import tpu as pltpu

EPS = 1e-12
LANES = 128


def tag_embeddings_kernel(ids_ref, table_ref, gamma_ref, beta_ref, out_ref):
    # ids_ref   : (TB, 1)   int32
    # table_ref : (Vp, H)   f32   (vocab padded to a multiple of 128 with zero rows)
    # gamma_ref : (1, H)    f32
    # beta_ref  : (1, H)    f32
    # out_ref   : (TB, H)   f32
    ids = ids_ref[...]                       # (TB, 1)
    table = table_ref[...]                   # (Vp, H)
    tb = ids.shape[0]
    vp = table.shape[0]
    h = table.shape[1]

    # Embedding gather as one-hot matmul (MXU friendly, exact for integer ids).
    # K dim = Vp is a multiple of 128 -> full-lane compare/cast and native MXU K.
    iota_v = jax.lax.broadcasted_iota(jnp.int32, (tb, vp), 1)
    onehot = (ids == iota_v).astype(jnp.float32)                       # (TB, Vp)
    emb = jnp.dot(onehot, table, preferred_element_type=jnp.float32)   # (TB, H)

    # TF-style LayerNorm over H: fused single-pass sum / sum-of-squares, rsqrt on EUP.
    inv_h = jnp.float32(1.0 / h)
    s1 = jnp.sum(emb, axis=-1, keepdims=True)            # (TB, 1)
    s2 = jnp.sum(emb * emb, axis=-1, keepdims=True)      # (TB, 1)
    u = s1 * inv_h
    var = jnp.maximum(s2 * inv_h - u * u, 0.0)           # biased variance, clamped >= 0
    inv = jax.lax.rsqrt(var + EPS)                       # single EUP transcendental
    x = (emb - u) * inv

    out_ref[...] = gamma_ref[...] * x + beta_ref[...]
    # TODO(synk): dropout is identity here (eval mode); training-mode dropout would use
    # pltpu.prng_seed / pltpu.prng_random_bits to build the keep mask in-kernel.


def tag_embeddings_forward(input_tag_ids, table, gamma, beta, *, token_block=512):
    B, S = input_tag_ids.shape
    V, H = table.shape
    N = B * S

    # Pick a token block: multiple of 8, capped so the grid keeps >= 2 steps when possible
    # (v7x has 2 TensorCores and only the 'parallel' token axis feeds the second core).
    half = pl.cdiv(N, 2)
    half_rounded = ((half + 7) // 8) * 8
    tb = max(8, min(token_block, half_rounded))

    # Pad token count to a multiple of tb with id 0 (padding row -> output = beta, sliced away).
    n_pad = pl.cdiv(N, tb) * tb
    ids_flat = input_tag_ids.reshape(N).astype(jnp.int32)
    ids_flat = jnp.pad(ids_flat, (0, n_pad - N)).reshape(n_pad, 1)

    # Pad vocab to a multiple of 128 with zero rows (lane-dense one-hot / MXU K dim).
    v_pad = pl.cdiv(V, LANES) * LANES
    table_p = jnp.zeros((v_pad, H), jnp.float32).at[:V, :].set(table.astype(jnp.float32))

    gamma2 = gamma.reshape(1, H).astype(jnp.float32)
    beta2 = beta.reshape(1, H).astype(jnp.float32)

    out = pl.pallas_call(
        tag_embeddings_kernel,
        out_shape=jax.ShapeDtypeStruct((n_pad, H), jnp.float32),
        grid_spec=pltpu.PrefetchScalarGridSpec(
            num_scalar_prefetch=0,
            grid=(n_pad // tb,),
            in_specs=[
                pl.BlockSpec((tb, 1), lambda i: (i, 0)),        # ids block
                pl.BlockSpec((v_pad, H), lambda i: (0, 0)),     # full (padded) table, resident
                pl.BlockSpec((1, H), lambda i: (0, 0)),         # gamma
                pl.BlockSpec((1, H), lambda i: (0, 0)),         # beta
            ],
            out_specs=pl.BlockSpec((tb, H), lambda i: (i, 0)),
        ),
        compiler_params=pltpu.CompilerParams(
            dimension_semantics=("parallel",),
        ),
    )(ids_flat, table_p, gamma2, beta2)

    return out[:N].reshape(B, S, H)


def tag_embeddings_reference(input_tag_ids, table, gamma, beta):
    emb = jnp.take(table, input_tag_ids, axis=0)
    u = jnp.mean(emb, axis=-1, keepdims=True)
    d = emb - u
    s = jnp.mean(d * d, axis=-1, keepdims=True)
    x = d / jnp.sqrt(s + EPS)
    return gamma * x + beta


if __name__ == "__main__":
    # Small config: tag_vocab_size=32, hidden_size=128, batch=2, seq=8.
    TAG_VOCAB_SIZE = 32
    HIDDEN_SIZE = 128
    B, S = 2, 8

    key = jax.random.PRNGKey(0)
    k_table, k_ids = jax.random.split(key)

    # Deterministic parameter init (nn.Embedding-like normal init, padding row 0 zeroed).
    table = 0.02 * jax.random.normal(k_table, (TAG_VOCAB_SIZE, HIDDEN_SIZE), dtype=jnp.float32)
    table = table.at[0].set(0.0)  # padding_idx=0 row is zeros
    gamma = jnp.ones((HIDDEN_SIZE,), dtype=jnp.float32)   # LayerNorm.weight
    beta = jnp.zeros((HIDDEN_SIZE,), dtype=jnp.float32)   # LayerNorm.bias

    input_tag_ids = jax.random.randint(k_ids, (B, S), 0, TAG_VOCAB_SIZE, dtype=jnp.int32)

    out = tag_embeddings_forward(input_tag_ids, table, gamma, beta)
    out = jax.block_until_ready(out)

    ref = tag_embeddings_reference(input_tag_ids, table, gamma, beta)
    assert out.shape == (B, S, HIDDEN_SIZE)
    # One-pass variance + rsqrt vs. the two-pass / sqrt+div reference: allow a slightly
    # looser (still tight) tolerance.
    assert jnp.allclose(out, ref, atol=1e-4, rtol=1e-4), "mismatch vs reference"

    print("KERNEL_OK")
</pallas_src>

<mosaic_0001>
module attributes {stable_mosaic.version = 11 : i64} {
  func.func @tag_embeddings_kernel(%arg0: i32, %arg1: memref<8x1xi32, #tpu.memory_space<vmem>>, %arg2: memref<128x128xf32, #tpu.memory_space<vmem>>, %arg3: memref<1x128xf32, #tpu.memory_space<vmem>>, %arg4: memref<1x128xf32, #tpu.memory_space<vmem>>, %arg5: memref<8x128xf32, #tpu.memory_space<vmem>>) attributes {dimension_semantics = [#tpu.dimension_semantics<parallel>], iteration_bounds = array<i64: 2>, scalar_prefetch = 0 : i64, scratch_operands = 0 : i64, tpu.core_type = #tpu.core_type<tc>, window_params = [{transform_indices = @transform_0, window_bounds = array<i64: 8, 1>}, {pipeline_mode = #tpu.pipeline_mode<synchronous>, transform_indices = @transform_1, window_bounds = array<i64: 128, 128>}, {pipeline_mode = #tpu.pipeline_mode<synchronous>, transform_indices = @transform_2, window_bounds = array<i64: 1, 128>}, {pipeline_mode = #tpu.pipeline_mode<synchronous>, transform_indices = @transform_3, window_bounds = array<i64: 1, 128>}, {transform_indices = @transform_4, window_bounds = array<i64: 8, 128>}]} {
    %c0 = arith.constant 0 : index
    %c0_0 = arith.constant 0 : index
    %0 = vector.load %arg1[%c0, %c0_0] : memref<8x1xi32, #tpu.memory_space<vmem>>, vector<8x1xi32>
    %c0_1 = arith.constant 0 : index
    %c0_2 = arith.constant 0 : index
    %1 = vector.load %arg2[%c0_1, %c0_2] : memref<128x128xf32, #tpu.memory_space<vmem>>, vector<128x128xf32>
    %2 = tpu.iota {dimensions = array<i32: 1>} : vector<8x128xi32>
    %3 = vector.broadcast %0 : vector<8x1xi32> to vector<8x128xi32>
    %4 = arith.cmpi eq, %3, %2 : vector<8x128xi32>
    %5 = arith.extui %4 : vector<8x128xi1> to vector<8x128xi32>
    %6 = arith.sitofp %5 : vector<8x128xi32> to vector<8x128xf32>
    %cst = arith.constant dense<0.000000e+00> : vector<8x128xf32>
    %7 = tpu.matmul %6, %1, %cst {dimension_numbers = #tpu.dot_dimension_numbers<[1], [0], [0], [1], [0, 0, 1, 1], [], []>} : vector<8x128xf32>, vector<128x128xf32>, vector<8x128xf32> -> vector<8x128xf32>
    %cst_3 = arith.constant dense<0.000000e+00> : vector<8xf32>
    %8 = vector.multi_reduction <add>, %7, %cst_3 [1] : vector<8x128xf32> to vector<8xf32>
    %9 = vector.shape_cast %8 : vector<8xf32> to vector<8x1xf32>
    %10 = arith.mulf %7, %7 : vector<8x128xf32>
    %cst_4 = arith.constant dense<0.000000e+00> : vector<8xf32>
    %11 = vector.multi_reduction <add>, %10, %cst_4 [1] : vector<8x128xf32> to vector<8xf32>
    %12 = vector.shape_cast %11 : vector<8xf32> to vector<8x1xf32>
    %cst_5 = arith.constant 7.812500e-03 : f32
    %13 = vector.broadcast %cst_5 : f32 to vector<8x1xf32>
    %14 = arith.mulf %9, %13 : vector<8x1xf32>
    %cst_6 = arith.constant 7.812500e-03 : f32
    %15 = vector.broadcast %cst_6 : f32 to vector<8x1xf32>
    %16 = arith.mulf %12, %15 : vector<8x1xf32>
    %17 = arith.mulf %14, %14 : vector<8x1xf32>
    %18 = arith.subf %16, %17 : vector<8x1xf32>
    %cst_7 = arith.constant 0.000000e+00 : f32
    %19 = vector.broadcast %cst_7 : f32 to vector<8x1xf32>
    %20 = arith.maximumf %18, %19 : vector<8x1xf32>
    %cst_8 = arith.constant 9.99999996E-13 : f32
    %21 = vector.broadcast %cst_8 : f32 to vector<8x1xf32>
    %22 = arith.addf %20, %21 : vector<8x1xf32>
    %23 = math.rsqrt %22 : vector<8x1xf32>
    %24 = vector.broadcast %14 : vector<8x1xf32> to vector<8x128xf32>
    %25 = arith.subf %7, %24 : vector<8x128xf32>
    %26 = vector.broadcast %23 : vector<8x1xf32> to vector<8x128xf32>
    %27 = arith.mulf %25, %26 : vector<8x128xf32>
    %c0_9 = arith.constant 0 : index
    %c0_10 = arith.constant 0 : index
    %28 = vector.load %arg3[%c0_9, %c0_10] : memref<1x128xf32, #tpu.memory_space<vmem>>, vector<1x128xf32>
    %29 = vector.broadcast %28 : vector<1x128xf32> to vector<8x128xf32>
    %30 = arith.mulf %29, %27 : vector<8x128xf32>
    %c0_11 = arith.constant 0 : index
    %c0_12 = arith.constant 0 : index
    %31 = vector.load %arg4[%c0_11, %c0_12] : memref<1x128xf32, #tpu.memory_space<vmem>>, vector<1x128xf32>
    %32 = vector.broadcast %31 : vector<1x128xf32> to vector<8x128xf32>
    %33 = arith.addf %30, %32 : vector<8x128xf32>
    %c0_13 = arith.constant 0 : index
    %c0_14 = arith.constant 0 : index
    %34 = vector.load %arg5[%c0_13, %c0_14] : memref<8x128xf32, #tpu.memory_space<vmem>>, vector<8x128xf32>
    tpu.vector_store %arg5[%c0_13, %c0_14], %33 {strides = array<i32>} : memref<8x128xf32, #tpu.memory_space<vmem>>, vector<8x128xf32>,
    return
  }
  func.func @transform_0(%arg0: i32) -> (i32, i32) {
    %c0_i32 = arith.constant 0 : i32
    %c0_i32_0 = arith.constant 0 : i32
    return %arg0, %c0_i32 : i32, i32
  }
  func.func @transform_1(%arg0: i32) -> (i32, i32) {
    %c0_i32 = arith.constant 0 : i32
    %c0_i32_0 = arith.constant 0 : i32
    %c0_i32_1 = arith.constant 0 : i32
    return %c0_i32, %c0_i32_0 : i32, i32
  }
  func.func @transform_2(%arg0: i32) -> (i32, i32) {
    %c0_i32 = arith.constant 0 : i32
    %c0_i32_0 = arith.constant 0 : i32
    %c0_i32_1 = arith.constant 0 : i32
    return %c0_i32, %c0_i32_0 : i32, i32
  }
  func.func @transform_3(%arg0: i32) -> (i32, i32) {
    %c0_i32 = arith.constant 0 : i32
    %c0_i32_0 = arith.constant 0 : i32
    %c0_i32_1 = arith.constant 0 : i32
    return %c0_i32, %c0_i32_0 : i32, i32
  }
  func.func @transform_4(%arg0: i32) -> (i32, i32) {
    %c0_i32 = arith.constant 0 : i32
    %c0_i32_0 = arith.constant 0 : i32
    return %arg0, %c0_i32 : i32, i32
  }
}

</mosaic_0001>

<llo_original>
// kernel: tpu_custom_call.1
$region0: #{tpu_custom_call.1}
  #allocation0 [shape = 'u32[]', space=smem, size = 0x4, offset = 0x4, fixed_abs, tag = 'smem constant byte address 0x4 - core index']
  #allocation1 [shape = 'u32[144,128]{1,0:T(1,128)}', space=vmem, size = 0x12000, scoped, tag = 'internal scratch']
  %s0 = inlined_call_operand.vmem [shape: s32[16,1], index: 0, kind: input, shape index: {}]
  %s1 = inlined_call_operand.hbm [shape: f32[128,128], index: 1, kind: input, shape index: {}]
  %s2 = inlined_call_operand.vmem [shape: f32[1,128], index: 2, kind: input, shape index: {}]
  %s3 = inlined_call_operand.vmem [shape: f32[1,128], index: 3, kind: input, shape index: {}]
  %s4 = inlined_call_operand.hbm [shape: f32[16,128], index: 4, kind: output, shape index: {}]
  %s5 = sld [smem:[#allocation0]]
  $region53: #{tpu_custom_call.1} parent=0
    _
  %s7 = ssub.s32 1, %s5
  %s8 = scalar_select 0, %s7, %s5
  $region1: #{tpu_custom_call.1} parent=0
    #allocation2 [shape = 'u8[65536]{0}', space=vmem, size = 0x10000, scoped, tag = 'input window, operand 1, single buffered']
    #allocation3 [shape = 's32[2]{0}', space=sflag, size = 0x8, scoped, tag = 'scoped memory for tpu_custom_call.1']
    #allocation4 [shape = 's32[2]{0}', space=sflag, size = 0x8, scoped, tag = 'scoped memory for tpu_custom_call.1']
    #allocation5 [shape = 'u8[8192]{0}', space=vmem, size = 0x2000, scoped, tag = 'output window, operand 0']
    %9 = vsyncpa [#allocation3], 0
    %10 = vsyncpa [#allocation4], 0
    %s11 = scalar_lea.sflag [#allocation4], 1
    %12 = vsyncpa %s11, 0
    loop: start=0, step=1, limit=4
    $region2: #{tpu_custom_call.1} parent=1 // loop_pre_header
      _
    $region3: #{tpu_custom_call.1} parent=1 // loop_header
      %s14 = sphi 0, %s18
      %p15 = scmp.ge.s32.totalorder %s14, 4
      %s24 = sphi 0, %s26
      %s27 = sphi 0, %s24
      %s28 = sphi 0, %s27
      %s44 = sphi 0, %s28
      %s48 = sphi 0, %s48
      %s50 = sphi 0, %s48
      %s51 = sphi 0, %s50
      %s65 = sphi 0, %s51
      %s69 = sphi 0, %s69
      %s71 = sphi 0, %s69
      %s72 = sphi 0, %s71
      %s86 = sphi 0, %s72
      %s90 = sphi 0, %s90
      %s92 = sphi 0, %s90
      %s93 = sphi 0, %s92
      %s107 = sphi 0, %s93
      %s113 = sphi 0, %s115
      %s116 = sphi 0, %s113
      %s117 = sphi 0, %s116
      %s133 = sphi 0, %s117
    $region4: #{tpu_custom_call.1} parent=1 // loop_header_branch
      %17 = sbr.rel (%p15) target = $region8
    $region5: #{tpu_custom_call.1} parent=1 // loop_body
      %s19 = ssub.s32 %s14, 1
      %s20 = ssub.s32 %s14, 2
      %s21 = sadd.s32 %s14, 1
      %s22 = ssub.s32 %s14, %s21
      %p23 = scmp.eq.s32.totalorder %s22, 0
      %s25 = sadd.s32 %s24, 1
      %s26 = scalar_select %p23, %s24, %s25
      %p29 = pneg %p23
      %p30 = scmp.eq.s32.totalorder %s14, 1
      %p31 = por %p29, %p30
      %p32 = scmp.ne.s32.totalorder %s24, %s27
      %p33 = scmp.eq.s32.totalorder %s14, 0
      %p34 = por %p32, %p33
      %p35 = scmp.ne.s32.totalorder %s24, %s27
      %p36 = scmp.eq.s32.totalorder %s19, 1
      %p37 = por %p35, %p36
      %p38 = scmp.ne.s32.totalorder %s27, %s28
      %p39 = scmp.eq.s32.totalorder %s19, 0
      %p40 = por %p38, %p39
      %p41 = scmp.ne.s32.totalorder %s27, %s28
      %p42 = scmp.eq.s32.totalorder %s20, 1
      %p43 = por %p41, %p42
      %p45 = scmp.ne.s32.totalorder %s28, %s44
      %p46 = scmp.eq.s32.totalorder %s20, 0
      %p47 = por %p45, %p46
      %s49 = sadd.s32 %s48, 1
      %p52 = scmp.eq.s32.totalorder %s14, 1
      %p53 = scmp.ne.s32.totalorder %s48, %s50
      %p54 = scmp.eq.s32.totalorder %s14, 0
      %p55 = por %p53, %p54
      %p56 = scmp.ne.s32.totalorder %s48, %s50
      %p57 = scmp.eq.s32.totalorder %s19, 1
      %p58 = por %p56, %p57
      %p59 = scmp.ne.s32.totalorder %s50, %s51
      %p60 = scmp.eq.s32.totalorder %s19, 0
      %p61 = por %p59, %p60
      %p62 = scmp.ne.s32.totalorder %s50, %s51
      %p63 = scmp.eq.s32.totalorder %s20, 1
      %p64 = por %p62, %p63
      %p66 = scmp.ne.s32.totalorder %s51, %s65
      %p67 = scmp.eq.s32.totalorder %s20, 0
      %p68 = por %p66, %p67
      %s70 = sadd.s32 %s69, 1
      %p73 = scmp.eq.s32.totalorder %s14, 1
      %p74 = scmp.ne.s32.totalorder %s69, %s71
      %p75 = scmp.eq.s32.totalorder %s14, 0
      %p76 = por %p74, %p75
      %p77 = scmp.ne.s32.totalorder %s69, %s71
      %p78 = scmp.eq.s32.totalorder %s19, 1
      %p79 = por %p77, %p78
      %p80 = scmp.ne.s32.totalorder %s71, %s72
      %p81 = scmp.eq.s32.totalorder %s19, 0
      %p82 = por %p80, %p81
      %p83 = scmp.ne.s32.totalorder %s71, %s72
      %p84 = scmp.eq.s32.totalorder %s20, 1
      %p85 = por %p83, %p84
      %p87 = scmp.ne.s32.totalorder %s72, %s86
      %p88 = scmp.eq.s32.totalorder %s20, 0
      %p89 = por %p87, %p88
      %s91 = sadd.s32 %s90, 1
      %p94 = scmp.eq.s32.totalorder %s14, 1
      %p95 = scmp.ne.s32.totalorder %s90, %s92
      %p96 = scmp.eq.s32.totalorder %s14, 0
      %p97 = por %p95, %p96
      %p98 = scmp.ne.s32.totalorder %s90, %s92
      %p99 = scmp.eq.s32.totalorder %s19, 1
      %p100 = por %p98, %p99
      %p101 = scmp.ne.s32.totalorder %s92, %s93
      %p102 = scmp.eq.s32.totalorder %s19, 0
      %p103 = por %p101, %p102
      %p104 = scmp.ne.s32.totalorder %s92, %s93
      %p105 = scmp.eq.s32.totalorder %s20, 1
      %p106 = por %p104, %p105
      %p108 = scmp.ne.s32.totalorder %s93, %s107
      %p109 = scmp.eq.s32.totalorder %s20, 0
      %p110 = por %p108, %p109
      %s111 = ssub.s32 %s14, %s21
      %p112 = scmp.eq.s32.totalorder %s111, 0
      %s114 = sadd.s32 %s113, 1
      %s115 = scalar_select %p112, %s113, %s114
      %p118 = pneg %p112
      %p119 = scmp.eq.s32.totalorder %s14, 1
      %p120 = por %p118, %p119
      %p121 = scmp.ne.s32.totalorder %s113, %s116
      %p122 = scmp.eq.s32.totalorder %s14, 0
      %p123 = por %p121, %p122
      %p124 = scmp.ne.s32.totalorder %s113, %s116
      %p125 = scmp.eq.s32.totalorder %s19, 1
      %p126 = por %p124, %p125
      %p127 = scmp.ne.s32.totalorder %s116, %s117
      %p128 = scmp.eq.s32.totalorder %s19, 0
      %p129 = por %p127, %p128
      %p130 = scmp.ne.s32.totalorder %s116, %s117
      %p131 = scmp.eq.s32.totalorder %s20, 1
      %p132 = por %p130, %p131
      %p134 = scmp.ne.s32.totalorder %s117, %s133
      %p135 = scmp.eq.s32.totalorder %s20, 0
      %p136 = por %p134, %p135
      %p137 = scmp.le.s32.totalorder 1, %s14
      %p138 = scmp.lt.s32.totalorder %s14, 3
      %p139 = pnand %p137, %p138
      %p140 = pneg %p139
      // Predicated region
      $region9: #{tpu_custom_call.1} parent=5 // pred_check
        _
      $region10: #{tpu_custom_call.1} parent=5 // pred_check_branch
        %142 = sbr.rel (%p139) target = $region12
      $region11: #{tpu_custom_call.1} parent=5 // pred_region
        %s143 = ssub.s32 %s14, 1
        // Predicated region
        $region13: #{tpu_custom_call.1} parent=11 // pred_check
          %p144 = pneg %p61
        $region14: #{tpu_custom_call.1} parent=11 // pred_check_branch
          %146 = sbr.rel (%p144) target = $region16
        $region15: #{tpu_custom_call.1} parent=11 // pred_region
          %s148 = ssub.s32 2048, 2048
          %149 = vsyncadd [#allocation3], %s148
          %s150 = sshll.u32 [#allocation2], 4
          %s151 = int_to_ptr.vmem [resolvable:$true] %s150
          %156 = dma.hbm_to_vmem [thread:$0]  %s1, 2048, %s151, [#allocation3], 128, 128, 8
        $region16: #{tpu_custom_call.1} parent=11 // pred_fallthru
          _
        // Predicated region
        $region17: #{tpu_custom_call.1} parent=11 // pred_check
          %p157 = pneg %p82
        $region18: #{tpu_custom_call.1} parent=11 // pred_check_branch
          %159 = sbr.rel (%p157) target = $region20
        $region19: #{tpu_custom_call.1} parent=11 // pred_region
          _
        $region20: #{tpu_custom_call.1} parent=11 // pred_fallthru
          _
        // Predicated region
        $region21: #{tpu_custom_call.1} parent=11 // pred_check
          %p160 = pneg %p103
        $region22: #{tpu_custom_call.1} parent=11 // pred_check_branch
          %162 = sbr.rel (%p160) target = $region24
        $region23: #{tpu_custom_call.1} parent=11 // pred_region
          _
        $region24: #{tpu_custom_call.1} parent=11 // pred_fallthru
          _
      $region12: #{tpu_custom_call.1} parent=5 // pred_fallthru
        _
      %p163 = scmp.lt.s32.totalorder %s14, 2
      // Predicated region
      $region25: #{tpu_custom_call.1} parent=5 // pred_check
        %p164 = pneg %p163
      $region26: #{tpu_custom_call.1} parent=5 // pred_check_branch
        %166 = sbr.rel (%p164) target = $region28
      $region27: #{tpu_custom_call.1} parent=5 // pred_region
        // Predicated region
        $region29: #{tpu_custom_call.1} parent=27 // pred_check
          %p167 = pneg %p34
        $region30: #{tpu_custom_call.1} parent=27 // pred_check_branch
          %169 = sbr.rel (%p167) target = $region32
        $region31: #{tpu_custom_call.1} parent=27 // pred_region
          %p170 = scmp.lt.s32.totalorder %s14, 1
          %s171 = scalar_select %p170, %s14, 1
          %s172 = smul.addr %s171, 8
          %s173 = scalar_lea.vmem %s0, %s172
        $region32: #{tpu_custom_call.1} parent=27 // pred_fallthru
          _
      $region28: #{tpu_custom_call.1} parent=5 // pred_fallthru
        _
      %p174 = scmp.le.s32.totalorder 1, %s14
      %p175 = scmp.lt.s32.totalorder %s14, 3
      %p176 = pnand %p174, %p175
      %p177 = pneg %p176
      // Predicated region
      $region33: #{tpu_custom_call.1} parent=5 // pred_check
        _
      $region34: #{tpu_custom_call.1} parent=5 // pred_check_branch
        %179 = sbr.rel (%p176) target = $region36
      $region35: #{tpu_custom_call.1} parent=5 // pred_region
        %s180 = ssub.s32 %s14, 1
        // Predicated region
        $region37: #{tpu_custom_call.1} parent=35 // pred_check
          %p181 = pneg %p61
        $region38: #{tpu_custom_call.1} parent=35 // pred_check_branch
          %183 = sbr.rel (%p181) target = $region40
        $region39: #{tpu_custom_call.1} parent=35 // pred_region
          %184 = dma.done [#allocation3], 2048
        $region40: #{tpu_custom_call.1} parent=35 // pred_fallthru
          _
        %p185 = scmp.lt.s32.totalorder %s19, 1
        %s186 = scalar_select %p185, %s19, 1
        %s187 = smul.addr %s186, 8
        %s188 = scalar_lea.vmem %s0, %s187
        %p189 = pneg %p40
        %p190 = pneg %p37
        %p191 = pneg %p61
        %p192 = pneg %p58
        %p193 = pneg %p82
        %p194 = pneg %p79
        %p195 = pneg %p103
        %p196 = pneg %p100
        %p197 = pneg %p129
        %p198 = pneg %p126
        %s199 = sand.u32 %s116, 1
        %s200 = scalar_lea.sflag [#allocation4], %s199
        %s201 = sand.u32 %s116, 1
        %s202 = smul.addr %s201, 8
        %s203 = scalar_lea.vmem [#allocation5], %s202
        %p204 = scmp.lt.s32.totalorder %s19, 1
        %s205 = scalar_select %p204, %s19, 1
        %s206 = smul.addr %s205, 8
        %s207 = scalar_lea.vmem %s0, %s206
        %v208 = vld [vmem:[%s207] sm:$0xff]
        %v209 = vld [vmem:[#allocation2] sm:$0xff]
        %v210 = vld [vmem:[#allocation2 + $0x8] sm:$0xff]
        %v211 = vld [vmem:[#allocation2 + $0x10] sm:$0xff]
        %v212 = vld [vmem:[#allocation2 + $0x18] sm:$0xff]
        %v213 = vld [vmem:[#allocation2 + $0x20] sm:$0xff]
        %v214 = vld [vmem:[#allocation2 + $0x28] sm:$0xff]
        %v215 = vld [vmem:[#allocation2 + $0x30] sm:$0xff]
        %v216 = vld [vmem:[#allocation2 + $0x38] sm:$0xff]
        %v217 = vld [vmem:[#allocation2 + $0x40] sm:$0xff]
        %v218 = vld [vmem:[#allocation2 + $0x48] sm:$0xff]
        %v219 = vld [vmem:[#allocation2 + $0x50] sm:$0xff]
        %v220 = vld [vmem:[#allocation2 + $0x58] sm:$0xff]
        %v221 = vld [vmem:[#allocation2 + $0x60] sm:$0xff]
        %v222 = vld [vmem:[#allocation2 + $0x68] sm:$0xff]
        %v223 = vld [vmem:[#allocation2 + $0x70] sm:$0xff]
        %v224 = vld [vmem:[#allocation2 + $0x78] sm:$0xff]
        %v225 = vlaneseq
        %v226 = vand.u32 %v225, 127
        %227 = vset.pattern.permute.xlu0 0
        %228 = vperm.xlu0 %227, %v208
        %v229 = vpop.permute.xlu0 %228
        %vm230 = vcmp.eq.s32.totalorder %v229, %v226
        %v231 = vsel %vm230, 1, 0
        %v232 = vcvt.s32.f32 %v231
        %233 = vmatprep.subr.mxu0 0.0
        %234 = vmatpush1.msra.mxu0 %v209
        %235 = vmatprep.subr.mxu0 0.0
        %236 = vmatpush1.msra.mxu0 %v210
        %237 = vmatprep.subr.mxu0 0.0
        %238 = vmatpush1.msra.mxu0 %v211
        %239 = vmatprep.subr.mxu0 0.0
        %240 = vmatpush1.msra.mxu0 %v212
        %241 = vmatprep.subr.mxu0 0.0
        %242 = vmatpush1.msra.mxu0 %v213
        %243 = vmatprep.subr.mxu0 0.0
        %244 = vmatpush1.msra.mxu0 %v214
        %245 = vmatprep.subr.mxu0 0.0
        %246 = vmatpush1.msra.mxu0 %v215
        %247 = vmatprep.subr.mxu0 0.0
        %248 = vmatpush1.msra.mxu0 %v216
        %249 = vmatprep.subr.mxu0 0.0
        %250 = vmatpush1.msra.mxu0 %v217
        %251 = vmatprep.subr.mxu0 0.0
        %252 = vmatpush1.msra.mxu0 %v218
        %253 = vmatprep.subr.mxu0 0.0
        %254 = vmatpush1.msra.mxu0 %v219
        %255 = vmatprep.subr.mxu0 0.0
        %256 = vmatpush1.msra.mxu0 %v220
        %257 = vmatprep.subr.mxu0 0.0
        %258 = vmatpush1.msra.mxu0 %v221
        %259 = vmatprep.subr.mxu0 0.0
        %260 = vmatpush1.msra.mxu0 %v222
        %261 = vmatprep.subr.mxu0 0.0
        %262 = vmatpush1.msra.mxu0 %v223
        %263 = vmatprep.subr.mxu0 0.0
        %264 = vmatpush1.msra.mxu0 %v224
        %265 = vmatprep.subr.mxu0 0.0
        %266 = vmatpush1.msra.mxu0 0.0
        %267 = vmatprep.subr.mxu0 0.0
        %268 = vmatpush1.msra.mxu0 0.0
        %269 = vmatprep.subr.mxu0 0.0
        %270 = vmatpush1.msra.mxu0 0.0
        %271 = vmatprep.subr.mxu0 0.0
        %272 = vmatpush1.msra.mxu0 0.0
        %273 = vmatprep.subr.mxu0 0.0
        %274 = vmatpush1.msra.mxu0 0.0
        %275 = vmatprep.subr.mxu0 0.0
        %276 = vmatpush1.msra.mxu0 0.0
        %277 = vmatprep.subr.mxu0 0.0
        %278 = vmatpush1.msra.mxu0 0.0
        %279 = vmatprep.subr.mxu0 0.0
        %280 = vmatpush1.msra.mxu0 0.0
        %281 = vmatprep.subr.mxu0 0.0
        %282 = vmatpush1.msra.mxu0 0.0
        %283 = vmatprep.subr.mxu0 0.0
        %284 = vmatpush1.msra.mxu0 0.0
        %285 = vmatprep.subr.mxu0 0.0
        %286 = vmatpush1.msra.mxu0 0.0
        %287 = vmatprep.subr.mxu0 0.0
        %288 = vmatpush1.msra.mxu0 0.0
        %289 = vmatprep.subr.mxu0 0.0
        %290 = vmatpush1.msra.mxu0 0.0
        %291 = vmatprep.subr.mxu0 0.0
        %292 = vmatpush1.msra.mxu0 0.0
        %293 = vmatprep.subr.mxu0 0.0
        %294 = vmatpush1.msra.mxu0 0.0
        %295 = vmatprep.subr.mxu0 0.0
        %296 = vmatpush1.msra.mxu0 0.0
        %297 = vmatprep.mubr.f32.mxu0 0.0
        %298 = vmatmul.mubr.f32.gmra.mrb[0].mxu0 %v232
        %v299 = vpop.f32.mrb[0].mxu0
        %v300 = vadd.f32 0.0, %v299
        %v301 = vpop.f32.mrb[0].mxu0
        %302 = vdwg.mxu0
        %303 = vadd.xlane.f32.xlu0 %v300
        %v304 = vpop.xlane.xlu0 %303
        %v305 = vmul.f32 %v300, %v300
        %306 = vadd.xlane.f32.xlu0 %v305
        %v307 = vpop.xlane.xlu0 %306
        %v308 = vmul.f32 %v304, 0.0078125
        %v309 = vmul.f32 %v307, 0.0078125
        %v310 = vmul.f32 %v308, %v308
        %v311 = vsub.f32 %v309, %v310
        %v312 = vmax.f32 %v311, 0.0
        %v313 = vadd.f32 %v312, 1e-12
        %v314 = vrsqrt.pop %v313
        %v315 = vsub.f32 %v300, %v308
        %v316 = vmul.f32 %v315, %v314
        %v317 = vld [vmem:[%s2] sm:$0x1]
        %v319 = vlaneseq
        %v320 = vshrl.u32 %v319, 7
        %v321 = vsub.s32 0, %v320
        %v322 = vrot.slane %v317, %v321
        %v324 = vmul.f32 %v322, %v316
        %v325 = vld [vmem:[%s3] sm:$0x1]
        %v327 = vlaneseq
        %v328 = vshrl.u32 %v327, 7
        %v329 = vsub.s32 0, %v328
        %v330 = vrot.slane %v325, %v329
        %v332 = vadd.f32 %v324, %v330
        %333 = vst [vmem:[%s203] sm:$0xff] %v332
        %s334 = sand.u32 %s116, 1
        %s335 = scalar_lea.sflag [#allocation4], %s334
        %s336 = sand.u32 %s116, 1
        %s337 = smul.addr %s336, 8
        %s338 = scalar_lea.vmem [#allocation5], %s337
        // Predicated region
        $region41: #{tpu_custom_call.1} parent=35 // pred_check
          %p339 = pneg %p126
        $region42: #{tpu_custom_call.1} parent=35 // pred_check_branch
          %341 = sbr.rel (%p339) target = $region44
        $region43: #{tpu_custom_call.1} parent=35 // pred_region
          %s343 = ssub.s32 128, 128
          %344 = vsyncadd %s335, %s343
          %s345 = smul.addr %s19, 128
          %s346 = scalar_lea.hbm %s4, %s345
          %s348 = sshll.u32 %s338, 4
          %s349 = int_to_ptr.vmem [resolvable:$true] %s348
          %351 = dma.vmem_to_hbm [thread:$0]  %s349, 128, %s346, %s335
        $region44: #{tpu_custom_call.1} parent=35 // pred_fallthru
          _
      $region36: #{tpu_custom_call.1} parent=5 // pred_fallthru
        _
      %p352 = scmp.le.s32.totalorder 2, %s14
      // Predicated region
      $region45: #{tpu_custom_call.1} parent=5 // pred_check
        %p353 = pneg %p352
      $region46: #{tpu_custom_call.1} parent=5 // pred_check_branch
        %355 = sbr.rel (%p353) target = $region48
      $region47: #{tpu_custom_call.1} parent=5 // pred_region
        %s356 = ssub.s32 %s14, 2
        // Predicated region
        $region49: #{tpu_custom_call.1} parent=47 // pred_check
          %p357 = pneg %p132
        $region50: #{tpu_custom_call.1} parent=47 // pred_check_branch
          %359 = sbr.rel (%p357) target = $region52
        $region51: #{tpu_custom_call.1} parent=47 // pred_region
          %s360 = sand.u32 %s117, 1
          %s361 = scalar_lea.sflag [#allocation4], %s360
          %s362 = sand.u32 %s117, 1
          %s363 = smul.addr %s362, 8
          %s364 = scalar_lea.vmem [#allocation5], %s363
          %365 = dma.done %s361, 128
        $region52: #{tpu_custom_call.1} parent=47 // pred_fallthru
          _
      $region48: #{tpu_custom_call.1} parent=5 // pred_fallthru
        _
    $region6: #{tpu_custom_call.1} parent=1 // loop_footer
      %s18 = sadd.s32 1, %s14
    $region7: #{tpu_custom_call.1} parent=1 // loop_footer_branch
      %13 = sbr.rel target = $region3
    $region8: #{tpu_custom_call.1} parent=1 // loop_exit
      _
    %366 = vsyncpa [#allocation3], 1
    %s367 = scalar_lea.sflag [#allocation3], 1
    %368 = vsyncpa %s367, 1
    %369 = vsyncpa [#allocation4], 1
    %s370 = scalar_lea.sflag [#allocation4], 1
    %371 = vsyncpa %s370, 1

</llo_original>
